<compile_context>
chip_gen: v6e
topology: v6e:2x2x1
jax: 0.10.0
libtpu: 0.0.40
codegen_flags: <defaults>
</compile_context>

<pallas_src>
import jax
import jax.numpy as jnp
from jax.experimental import pallas as pl
from jax.experimental.pallas import tpu as pltpu

HIDDEN = 128
MAX_TILE_BYTES = 4 * 1024 * 1024   # w2 bytes per tile (double-buffered -> 8 MiB)
CHUNK_COLS = 1024                  # in-kernel layer-2 sub-chunk (bounds vregs)


# ---------------------------------------------------------------------------
# Kernel
# ---------------------------------------------------------------------------
def hypernet_kernel(x_ref, w1_ref, b1_ref, w2_ref, b2_ref, o_ref):
    # Layer 1 + ReLU.  Tiny (B x K x 128); recomputed per O-tile so the grid
    # axis carries no state and can be sharded across TensorCores.
    h = jnp.dot(x_ref[...], w1_ref[...], preferred_element_type=jnp.float32)
    h = jnp.maximum(h + b1_ref[...].astype(jnp.float32), 0.0)
    h = h.astype(w2_ref.dtype)

    tile_o = w2_ref.shape[-1]                 # static
    chunk = min(CHUNK_COLS, tile_o)           # static
    n_full = tile_o // chunk
    rem = tile_o - n_full * chunk             # multiple of 128 (or 0)

    def do_chunk(off, width):
        w2c = w2_ref[:, pl.ds(off, width)]
        y = jnp.dot(h, w2c, preferred_element_type=jnp.float32)
        y = y + b2_ref[:, pl.ds(off, width)].astype(jnp.float32)
        o_ref[:, pl.ds(off, width)] = y.astype(o_ref.dtype)

    if n_full > 0:
        def body(c, carry):
            do_chunk(pl.multiple_of(c * chunk, 128), chunk)
            return carry
        jax.lax.fori_loop(0, n_full, body, 0, unroll=True)
    if rem > 0:
        do_chunk(n_full * chunk, rem)         # static remainder chunk


# ---------------------------------------------------------------------------
# Wrapper / parameter prep
# ---------------------------------------------------------------------------
def _choose_tiling(o_pad, w2_itemsize):
    """Balanced O tiling: big tiles (<= MAX_TILE_BYTES of w2), >= 2 tiles when
    possible (v7x megacore), no tile that is mostly zero padding."""
    n128 = o_pad // 128
    max_cols = max(128, (MAX_TILE_BYTES // (HIDDEN * w2_itemsize)) // 128 * 128)
    grid_o = pl.cdiv(o_pad, max_cols)
    if o_pad >= 256:
        grid_o = max(grid_o, 2)               # let both v7x TCs stream w2
    tile_o = pl.cdiv(n128, grid_o) * 128
    grid_o = pl.cdiv(o_pad, tile_o)
    return tile_o, grid_o


def prepare_hypernetwork_params(w1, b1, w2, b2):
    """One-time prep: pad w2/b2 out-dim to a multiple of 128 and reshape the
    biases to rows, so the per-call forward never copies w2 in HBM."""
    H, O = w2.shape
    assert w1.shape[1] == HIDDEN and H == HIDDEN
    o_pad = pl.cdiv(O, 128) * 128
    if o_pad != O:
        w2 = jnp.pad(w2, ((0, 0), (0, o_pad - O)))
        b2 = jnp.pad(b2, (0, o_pad - O))
    return w1, b1.reshape(1, HIDDEN), w2, b2.reshape(1, o_pad), O


def hypernetwork_forward(x, w1, b1_row, w2_p, b2_row, num_weights):
    """x: (B, input_dim). Params from prepare_hypernetwork_params (w2_p/b2_row
    out-dim already a multiple of 128). Returns (B, num_weights)."""
    B, K = x.shape
    Kw, H = w1.shape
    Hw, o_pad = w2_p.shape
    assert K == Kw and H == HIDDEN and Hw == HIDDEN
    assert o_pad % 128 == 0 and num_weights <= o_pad

    w2_itemsize = jnp.dtype(w2_p.dtype).itemsize
    tile_o, grid_o = _choose_tiling(o_pad, w2_itemsize)

    # VMEM limit sized to actual (double-buffered) tiles + headroom, never the
    # full physical VMEM (v7x only has 64 MiB per TC).
    x_it = jnp.dtype(x.dtype).itemsize
    buf_bytes = (
        2 * (HIDDEN * tile_o * w2_itemsize                       # w2 tile
             + tile_o * jnp.dtype(b2_row.dtype).itemsize         # b2 tile
             + B * tile_o * x_it)                                # out tile
        + 2 * (B * K * x_it
               + K * HIDDEN * jnp.dtype(w1.dtype).itemsize
               + HIDDEN * jnp.dtype(b1_row.dtype).itemsize)      # resident
    )
    vmem_limit = int(buf_bytes) + 4 * 1024 * 1024                # Mosaic scratch

    nbytes = lambda a: a.size * jnp.dtype(a.dtype).itemsize
    cost = pl.CostEstimate(
        flops=2 * B * K * HIDDEN * grid_o + 2 * B * HIDDEN * o_pad,
        transcendentals=0,
        bytes_accessed=(nbytes(x) + nbytes(w1) + nbytes(b1_row)
                        + nbytes(w2_p) + nbytes(b2_row) + B * o_pad * x_it),
    )

    out_p = pl.pallas_call(
        hypernet_kernel,
        out_shape=jax.ShapeDtypeStruct((B, o_pad), x.dtype),
        grid=(grid_o,),
        in_specs=[
            pl.BlockSpec((B, K), lambda j: (0, 0)),        # x   (resident)
            pl.BlockSpec((K, H), lambda j: (0, 0)),        # w1  (resident)
            pl.BlockSpec((1, H), lambda j: (0, 0)),        # b1  (resident)
            pl.BlockSpec((H, tile_o), lambda j: (0, j)),   # w2  (streamed over O)
            pl.BlockSpec((1, tile_o), lambda j: (0, j)),   # b2  (streamed over O)
        ],
        out_specs=pl.BlockSpec((B, tile_o), lambda j: (0, j)),
        compiler_params=pltpu.CompilerParams(
            dimension_semantics=("parallel",),   # shard O tiles across TCs
            vmem_limit_bytes=vmem_limit,
        ),
        cost_estimate=cost,
    )(x, w1, b1_row, w2_p, b2_row)

    return out_p[:, :num_weights] if o_pad != num_weights else out_p


def hypernetwork_apply(x, w1, b1, w2, b2):
    """Convenience path for unpadded params (pays a one-off pad copy per call;
    prefer prepare_hypernetwork_params + hypernetwork_forward)."""
    return hypernetwork_forward(x, *prepare_hypernetwork_params(w1, b1, w2, b2))


# ---------------------------------------------------------------------------
# Reference & init
# ---------------------------------------------------------------------------
def hypernetwork_reference(x, w1, b1, w2, b2):
    """Pure-JAX reference mirroring the kernel's dtype path exactly."""
    h = jnp.dot(x, w1, preferred_element_type=jnp.float32)
    h = jnp.maximum(h + b1.astype(jnp.float32), 0.0)
    y = jnp.dot(h.astype(w2.dtype), w2, preferred_element_type=jnp.float32)
    return (y + b2.astype(jnp.float32)).astype(x.dtype)


def init_hypernetwork_params(key, input_dim, num_weights_to_generate,
                             dtype=jnp.float32):
    """Deterministic init mirroring nn.Linear's uniform(-1/sqrt(fan_in), ...)."""
    k1, k2, k3, k4 = jax.random.split(key, 4)
    bound1 = 1.0 / float(input_dim) ** 0.5
    bound2 = 1.0 / float(HIDDEN) ** 0.5
    # stored as (in_features, out_features) so forward is x @ W + b (== x @ W.T in torch)
    w1 = jax.random.uniform(k1, (input_dim, HIDDEN), dtype, -bound1, bound1)
    b1 = jax.random.uniform(k2, (HIDDEN,), dtype, -bound1, bound1)
    w2 = jax.random.uniform(k3, (HIDDEN, num_weights_to_generate), dtype,
                            -bound2, bound2)
    b2 = jax.random.uniform(k4, (num_weights_to_generate,), dtype,
                            -bound2, bound2)
    return w1, b1, w2, b2


# ---------------------------------------------------------------------------
# Self-test
# ---------------------------------------------------------------------------
if __name__ == "__main__":
    key = jax.random.PRNGKey(0)
    kx, kp, kp2 = jax.random.split(key, 3)

    batch = 8
    input_dim = 32

    # ---- f32, small O (not a multiple of 128 -> padding + 2-tile path) ----
    O1 = 200
    x = jax.random.normal(kx, (batch, input_dim), jnp.float32)
    w1, b1, w2, b2 = init_hypernetwork_params(kp, input_dim, O1)
    params = prepare_hypernetwork_params(w1, b1, w2, b2)   # pad ONCE
    out = jax.block_until_ready(hypernetwork_forward(x, *params))
    ref = hypernetwork_reference(x, w1, b1, w2, b2)
    assert out.shape == (batch, O1)
    assert jnp.allclose(out, ref, atol=1e-5, rtol=1e-5)

    # ---- f32, larger O (multi-tile + in-kernel chunked layer 2) ----
    O2 = 5000
    w1b, b1b, w2b, b2b = init_hypernetwork_params(kp2, input_dim, O2)
    params2 = prepare_hypernetwork_params(w1b, b1b, w2b, b2b)
    out2 = jax.block_until_ready(hypernetwork_forward(x, *params2))
    ref2 = hypernetwork_reference(x, w1b, b1b, w2b, b2b)
    assert out2.shape == (batch, O2)
    assert jnp.allclose(out2, ref2, atol=1e-5, rtol=1e-5)

    # ---- bf16 path (halves w2 HBM traffic; f32 accumulation) ----
    xb = x.astype(jnp.bfloat16)
    w1h, b1h, w2h, b2h = (a.astype(jnp.bfloat16) for a in (w1, b1, w2, b2))
    out_bf = jax.block_until_ready(hypernetwork_apply(xb, w1h, b1h, w2h, b2h))
    ref_bf = hypernetwork_reference(xb, w1h, b1h, w2h, b2h)
    assert out_bf.shape == (batch, O1)
    assert jnp.allclose(out_bf.astype(jnp.float32), ref_bf.astype(jnp.float32),
                        atol=5e-2, rtol=5e-2)

    print("KERNEL_OK")
</pallas_src>

<mosaic_0001>
module attributes {stable_mosaic.version = 11 : i64} {
  func.func @hypernet_kernel(%arg0: i32, %arg1: memref<8x32xf32, #tpu.memory_space<vmem>>, %arg2: memref<32x128xf32, #tpu.memory_space<vmem>>, %arg3: memref<1x128xf32, #tpu.memory_space<vmem>>, %arg4: memref<128x128xf32, #tpu.memory_space<vmem>>, %arg5: memref<1x128xf32, #tpu.memory_space<vmem>>, %arg6: memref<8x128xf32, #tpu.memory_space<vmem>>) attributes {dimension_semantics = [#tpu.dimension_semantics<parallel>], iteration_bounds = array<i64: 2>, scalar_prefetch = 0 : i64, scratch_operands = 0 : i64, tpu.core_type = #tpu.core_type<tc>, window_params = [{pipeline_mode = #tpu.pipeline_mode<synchronous>, transform_indices = @transform_0, window_bounds = array<i64: 8, 32>}, {pipeline_mode = #tpu.pipeline_mode<synchronous>, transform_indices = @transform_1, window_bounds = array<i64: 32, 128>}, {pipeline_mode = #tpu.pipeline_mode<synchronous>, transform_indices = @transform_2, window_bounds = array<i64: 1, 128>}, {transform_indices = @transform_3, window_bounds = array<i64: 128, 128>}, {transform_indices = @transform_4, window_bounds = array<i64: 1, 128>}, {transform_indices = @transform_5, window_bounds = array<i64: 8, 128>}]} {
    %c0 = arith.constant 0 : index
    %c0_0 = arith.constant 0 : index
    %0 = vector.load %arg1[%c0, %c0_0] : memref<8x32xf32, #tpu.memory_space<vmem>>, vector<8x32xf32>
    %c0_1 = arith.constant 0 : index
    %c0_2 = arith.constant 0 : index
    %1 = vector.load %arg2[%c0_1, %c0_2] : memref<32x128xf32, #tpu.memory_space<vmem>>, vector<32x128xf32>
    %cst = arith.constant dense<0.000000e+00> : vector<8x128xf32>
    %2 = tpu.matmul %0, %1, %cst {dimension_numbers = #tpu.dot_dimension_numbers<[1], [0], [0], [1], [0, 0, 1, 1], [], []>} : vector<8x32xf32>, vector<32x128xf32>, vector<8x128xf32> -> vector<8x128xf32>
    %c0_3 = arith.constant 0 : index
    %c0_4 = arith.constant 0 : index
    %3 = vector.load %arg3[%c0_3, %c0_4] : memref<1x128xf32, #tpu.memory_space<vmem>>, vector<1x128xf32>
    %4 = vector.broadcast %3 : vector<1x128xf32> to vector<8x128xf32>
    %5 = arith.addf %2, %4 : vector<8x128xf32>
    %cst_5 = arith.constant 0.000000e+00 : f32
    %6 = vector.broadcast %cst_5 : f32 to vector<8x128xf32>
    %7 = arith.maximumf %5, %6 : vector<8x128xf32>
    %c0_i32 = arith.constant 0 : i32
    %c128_i32 = arith.constant 128 : i32
    %8 = arith.muli %c0_i32, %c128_i32 : i32
    %9 = tpu.assume_multiple %8, 128 : i32
    %c0_6 = arith.constant 0 : index
    %10 = arith.index_cast %9 : i32 to index
    %11 = vector.load %arg4[%c0_6, %10] : memref<128x128xf32, #tpu.memory_space<vmem>>, vector<128x128xf32>
    %cst_7 = arith.constant dense<0.000000e+00> : vector<8x128xf32>
    %12 = tpu.matmul %7, %11, %cst_7 {dimension_numbers = #tpu.dot_dimension_numbers<[1], [0], [0], [1], [0, 0, 1, 1], [], []>} : vector<8x128xf32>, vector<128x128xf32>, vector<8x128xf32> -> vector<8x128xf32>
    %c0_8 = arith.constant 0 : index
    %13 = arith.index_cast %9 : i32 to index
    %14 = vector.load %arg5[%c0_8, %13] : memref<1x128xf32, #tpu.memory_space<vmem>>, vector<1x128xf32>
    %15 = vector.broadcast %14 : vector<1x128xf32> to vector<8x128xf32>
    %16 = arith.addf %12, %15 : vector<8x128xf32>
    %c0_9 = arith.constant 0 : index
    %17 = arith.index_cast %9 : i32 to index
    %18 = vector.load %arg6[%c0_9, %17] : memref<8x128xf32, #tpu.memory_space<vmem>>, vector<8x128xf32>
    tpu.vector_store %arg6[%c0_9, %17], %16 {strides = array<i32>} : memref<8x128xf32, #tpu.memory_space<vmem>>, vector<8x128xf32>,
    %c1_i32 = arith.constant 1 : i32
    return
  }
  func.func @transform_0(%arg0: i32) -> (i32, i32) {
    %c0_i32 = arith.constant 0 : i32
    %c0_i32_0 = arith.constant 0 : i32
    %c0_i32_1 = arith.constant 0 : i32
    return %c0_i32, %c0_i32_0 : i32, i32
  }
  func.func @transform_1(%arg0: i32) -> (i32, i32) {
    %c0_i32 = arith.constant 0 : i32
    %c0_i32_0 = arith.constant 0 : i32
    %c0_i32_1 = arith.constant 0 : i32
    return %c0_i32, %c0_i32_0 : i32, i32
  }
  func.func @transform_2(%arg0: i32) -> (i32, i32) {
    %c0_i32 = arith.constant 0 : i32
    %c0_i32_0 = arith.constant 0 : i32
    %c0_i32_1 = arith.constant 0 : i32
    return %c0_i32, %c0_i32_0 : i32, i32
  }
  func.func @transform_3(%arg0: i32) -> (i32, i32) {
    %c0_i32 = arith.constant 0 : i32
    %c0_i32_0 = arith.constant 0 : i32
    return %c0_i32, %arg0 : i32, i32
  }
  func.func @transform_4(%arg0: i32) -> (i32, i32) {
    %c0_i32 = arith.constant 0 : i32
    %c0_i32_0 = arith.constant 0 : i32
    return %c0_i32, %arg0 : i32, i32
  }
  func.func @transform_5(%arg0: i32) -> (i32, i32) {
    %c0_i32 = arith.constant 0 : i32
    %c0_i32_0 = arith.constant 0 : i32
    return %c0_i32, %arg0 : i32, i32
  }
}

</mosaic_0001>

<llo_original>
// kernel: tpu_custom_call.1
$region0: #{tpu_custom_call.1}
  #allocation0 [shape = 'u32[]', space=smem, size = 0x4, offset = 0x4, fixed_abs, tag = 'smem constant byte address 0x4 - core index']
  #allocation1 [shape = 'u32[144,128]{1,0:T(1,128)}', space=vmem, size = 0x12000, scoped, tag = 'internal scratch']
  %s0 = inlined_call_operand.hbm [shape: f32[8,32], index: 0, kind: input, shape index: {}]
  %s1 = inlined_call_operand.hbm [shape: f32[32,128], index: 1, kind: input, shape index: {}]
  %s2 = inlined_call_operand.vmem [shape: f32[1,128], index: 2, kind: input, shape index: {}]
  %s3 = inlined_call_operand.hbm [shape: f32[128,256], index: 3, kind: input, shape index: {}]
  %s4 = inlined_call_operand.vmem [shape: f32[1,256], index: 4, kind: input, shape index: {}]
  %s5 = inlined_call_operand.hbm [shape: f32[8,256], index: 5, kind: output, shape index: {}]
  %s6 = sld [smem:[#allocation0]]
  $region65: #{tpu_custom_call.1} parent=0
    _
  %s8 = ssub.s32 1, %s6
  %s9 = scalar_select 0, %s8, %s6
  $region1: #{tpu_custom_call.1} parent=0
    #allocation2 [shape = 'u8[4096]{0}', space=vmem, size = 0x1000, scoped, tag = 'input window, operand 0, single buffered']
    #allocation3 [shape = 's32[2]{0}', space=sflag, size = 0x8, scoped, tag = 'scoped memory for tpu_custom_call.1']
    #allocation4 [shape = 's32[2]{0}', space=sflag, size = 0x8, scoped, tag = 'scoped memory for tpu_custom_call.1']
    #allocation5 [shape = 'u8[16384]{0}', space=vmem, size = 0x4000, scoped, tag = 'input window, operand 1, single buffered']
    #allocation6 [shape = 's32[1]{0}', space=sflag, size = 0x4, scoped, tag = 'scoped memory for tpu_custom_call.1']
    #allocation7 [shape = 'u8[131072]{0}', space=vmem, size = 0x20000, scoped, tag = 'input window, operand 3']
    #allocation8 [shape = 'u8[8192]{0}', space=vmem, size = 0x2000, scoped, tag = 'output window, operand 0']
    %10 = vsyncpa [#allocation3], 0
    %11 = vsyncpa [#allocation6], 0
    %12 = vsyncpa [#allocation4], 0
    %s13 = scalar_lea.sflag [#allocation4], 1
    %14 = vsyncpa %s13, 0
    loop: start=0, step=1, limit=4
    $region2: #{tpu_custom_call.1} parent=1 // loop_pre_header
      _
    $region3: #{tpu_custom_call.1} parent=1 // loop_header
      %s16 = sphi 0, %s20
      %p17 = scmp.ge.s32.totalorder %s16, 4
      %s24 = sphi 0, %s24
      %s26 = sphi 0, %s24
      %s27 = sphi 0, %s26
      %s41 = sphi 0, %s27
      %s45 = sphi 0, %s45
      %s47 = sphi 0, %s45
      %s48 = sphi 0, %s47
      %s62 = sphi 0, %s48
      %s66 = sphi 0, %s66
      %s68 = sphi 0, %s66
      %s69 = sphi 0, %s68
      %s83 = sphi 0, %s69
      %s89 = sphi 0, %s91
      %s92 = sphi 0, %s89
      %s93 = sphi 0, %s92
      %s109 = sphi 0, %s93
      %s115 = sphi 0, %s117
      %s118 = sphi 0, %s115
      %s119 = sphi 0, %s118
      %s135 = sphi 0, %s119
      %s141 = sphi 0, %s143
      %s144 = sphi 0, %s141
      %s145 = sphi 0, %s144
      %s161 = sphi 0, %s145
    $region4: #{tpu_custom_call.1} parent=1 // loop_header_branch
      %19 = sbr.rel (%p17) target = $region8
    $region5: #{tpu_custom_call.1} parent=1 // loop_body
      %s21 = ssub.s32 %s16, 1
      %s22 = ssub.s32 %s16, 2
      %s23 = sadd.s32 %s16, 1
      %s25 = sadd.s32 %s24, 1
      %p28 = scmp.eq.s32.totalorder %s16, 1
      %p29 = scmp.ne.s32.totalorder %s24, %s26
      %p30 = scmp.eq.s32.totalorder %s16, 0
      %p31 = por %p29, %p30
      %p32 = scmp.ne.s32.totalorder %s24, %s26
      %p33 = scmp.eq.s32.totalorder %s21, 1
      %p34 = por %p32, %p33
      %p35 = scmp.ne.s32.totalorder %s26, %s27
      %p36 = scmp.eq.s32.totalorder %s21, 0
      %p37 = por %p35, %p36
      %p38 = scmp.ne.s32.totalorder %s26, %s27
      %p39 = scmp.eq.s32.totalorder %s22, 1
      %p40 = por %p38, %p39
      %p42 = scmp.ne.s32.totalorder %s27, %s41
      %p43 = scmp.eq.s32.totalorder %s22, 0
      %p44 = por %p42, %p43
      %s46 = sadd.s32 %s45, 1
      %p49 = scmp.eq.s32.totalorder %s16, 1
      %p50 = scmp.ne.s32.totalorder %s45, %s47
      %p51 = scmp.eq.s32.totalorder %s16, 0
      %p52 = por %p50, %p51
      %p53 = scmp.ne.s32.totalorder %s45, %s47
      %p54 = scmp.eq.s32.totalorder %s21, 1
      %p55 = por %p53, %p54
      %p56 = scmp.ne.s32.totalorder %s47, %s48
      %p57 = scmp.eq.s32.totalorder %s21, 0
      %p58 = por %p56, %p57
      %p59 = scmp.ne.s32.totalorder %s47, %s48
      %p60 = scmp.eq.s32.totalorder %s22, 1
      %p61 = por %p59, %p60
      %p63 = scmp.ne.s32.totalorder %s48, %s62
      %p64 = scmp.eq.s32.totalorder %s22, 0
      %p65 = por %p63, %p64
      %s67 = sadd.s32 %s66, 1
      %p70 = scmp.eq.s32.totalorder %s16, 1
      %p71 = scmp.ne.s32.totalorder %s66, %s68
      %p72 = scmp.eq.s32.totalorder %s16, 0
      %p73 = por %p71, %p72
      %p74 = scmp.ne.s32.totalorder %s66, %s68
      %p75 = scmp.eq.s32.totalorder %s21, 1
      %p76 = por %p74, %p75
      %p77 = scmp.ne.s32.totalorder %s68, %s69
      %p78 = scmp.eq.s32.totalorder %s21, 0
      %p79 = por %p77, %p78
      %p80 = scmp.ne.s32.totalorder %s68, %s69
      %p81 = scmp.eq.s32.totalorder %s22, 1
      %p82 = por %p80, %p81
      %p84 = scmp.ne.s32.totalorder %s69, %s83
      %p85 = scmp.eq.s32.totalorder %s22, 0
      %p86 = por %p84, %p85
      %s87 = ssub.s32 %s16, %s23
      %p88 = scmp.eq.s32.totalorder %s87, 0
      %s90 = sadd.s32 %s89, 1
      %s91 = scalar_select %p88, %s89, %s90
      %p94 = pneg %p88
      %p95 = scmp.eq.s32.totalorder %s16, 1
      %p96 = por %p94, %p95
      %p97 = scmp.ne.s32.totalorder %s89, %s92
      %p98 = scmp.eq.s32.totalorder %s16, 0
      %p99 = por %p97, %p98
      %p100 = scmp.ne.s32.totalorder %s89, %s92
      %p101 = scmp.eq.s32.totalorder %s21, 1
      %p102 = por %p100, %p101
      %p103 = scmp.ne.s32.totalorder %s92, %s93
      %p104 = scmp.eq.s32.totalorder %s21, 0
      %p105 = por %p103, %p104
      %p106 = scmp.ne.s32.totalorder %s92, %s93
      %p107 = scmp.eq.s32.totalorder %s22, 1
      %p108 = por %p106, %p107
      %p110 = scmp.ne.s32.totalorder %s93, %s109
      %p111 = scmp.eq.s32.totalorder %s22, 0
      %p112 = por %p110, %p111
      %s113 = ssub.s32 %s16, %s23
      %p114 = scmp.eq.s32.totalorder %s113, 0
      %s116 = sadd.s32 %s115, 1
      %s117 = scalar_select %p114, %s115, %s116
      %p120 = pneg %p114
      %p121 = scmp.eq.s32.totalorder %s16, 1
      %p122 = por %p120, %p121
      %p123 = scmp.ne.s32.totalorder %s115, %s118
      %p124 = scmp.eq.s32.totalorder %s16, 0
      %p125 = por %p123, %p124
      %p126 = scmp.ne.s32.totalorder %s115, %s118
      %p127 = scmp.eq.s32.totalorder %s21, 1
      %p128 = por %p126, %p127
      %p129 = scmp.ne.s32.totalorder %s118, %s119
      %p130 = scmp.eq.s32.totalorder %s21, 0
      %p131 = por %p129, %p130
      %p132 = scmp.ne.s32.totalorder %s118, %s119
      %p133 = scmp.eq.s32.totalorder %s22, 1
      %p134 = por %p132, %p133
      %p136 = scmp.ne.s32.totalorder %s119, %s135
      %p137 = scmp.eq.s32.totalorder %s22, 0
      %p138 = por %p136, %p137
      %s139 = ssub.s32 %s16, %s23
      %p140 = scmp.eq.s32.totalorder %s139, 0
      %s142 = sadd.s32 %s141, 1
      %s143 = scalar_select %p140, %s141, %s142
      %p146 = pneg %p140
      %p147 = scmp.eq.s32.totalorder %s16, 1
      %p148 = por %p146, %p147
      %p149 = scmp.ne.s32.totalorder %s141, %s144
      %p150 = scmp.eq.s32.totalorder %s16, 0
      %p151 = por %p149, %p150
      %p152 = scmp.ne.s32.totalorder %s141, %s144
      %p153 = scmp.eq.s32.totalorder %s21, 1
      %p154 = por %p152, %p153
      %p155 = scmp.ne.s32.totalorder %s144, %s145
      %p156 = scmp.eq.s32.totalorder %s21, 0
      %p157 = por %p155, %p156
      %p158 = scmp.ne.s32.totalorder %s144, %s145
      %p159 = scmp.eq.s32.totalorder %s22, 1
      %p160 = por %p158, %p159
      %p162 = scmp.ne.s32.totalorder %s145, %s161
      %p163 = scmp.eq.s32.totalorder %s22, 0
      %p164 = por %p162, %p163
      %p165 = scmp.le.s32.totalorder 1, %s16
      %p166 = scmp.lt.s32.totalorder %s16, 3
      %p167 = pnand %p165, %p166
      %p168 = pneg %p167
      // Predicated region
      $region9: #{tpu_custom_call.1} parent=5 // pred_check
        _
      $region10: #{tpu_custom_call.1} parent=5 // pred_check_branch
        %170 = sbr.rel (%p167) target = $region12
      $region11: #{tpu_custom_call.1} parent=5 // pred_region
        %s171 = ssub.s32 %s16, 1
        // Predicated region
        $region13: #{tpu_custom_call.1} parent=11 // pred_check
          %p172 = pneg %p37
        $region14: #{tpu_custom_call.1} parent=11 // pred_check_branch
          %174 = sbr.rel (%p172) target = $region16
        $region15: #{tpu_custom_call.1} parent=11 // pred_region
          %s176 = ssub.s32 128, 128
          %177 = vsyncadd [#allocation3], %s176
          %s179 = sshll.u32 [#allocation2], 4
          %s180 = int_to_ptr.vmem [resolvable:$true] %s179
          %182 = dma.hbm_to_vmem [thread:$0]  %s0, 128, %s180, [#allocation3]
        $region16: #{tpu_custom_call.1} parent=11 // pred_fallthru
          _
        // Predicated region
        $region17: #{tpu_custom_call.1} parent=11 // pred_check
          %p183 = pneg %p58
        $region18: #{tpu_custom_call.1} parent=11 // pred_check_branch
          %185 = sbr.rel (%p183) target = $region20
        $region19: #{tpu_custom_call.1} parent=11 // pred_region
          %s187 = ssub.s32 512, 512
          %188 = vsyncadd [#allocation6], %s187
          %s189 = sshll.u32 [#allocation5], 4
          %s190 = int_to_ptr.vmem [resolvable:$true] %s189
          %195 = dma.hbm_to_vmem [thread:$0]  %s1, 512, %s190, [#allocation6], 128, 128, 8
        $region20: #{tpu_custom_call.1} parent=11 // pred_fallthru
          _
        // Predicated region
        $region21: #{tpu_custom_call.1} parent=11 // pred_check
          %p196 = pneg %p79
        $region22: #{tpu_custom_call.1} parent=11 // pred_check_branch
          %198 = sbr.rel (%p196) target = $region24
        $region23: #{tpu_custom_call.1} parent=11 // pred_region
          _
        $region24: #{tpu_custom_call.1} parent=11 // pred_fallthru
          _
      $region12: #{tpu_custom_call.1} parent=5 // pred_fallthru
        _
      %p199 = scmp.lt.s32.totalorder %s16, 2
      // Predicated region
      $region25: #{tpu_custom_call.1} parent=5 // pred_check
        %p200 = pneg %p199
      $region26: #{tpu_custom_call.1} parent=5 // pred_check_branch
        %202 = sbr.rel (%p200) target = $region28
      $region27: #{tpu_custom_call.1} parent=5 // pred_region
        // Predicated region
        $region29: #{tpu_custom_call.1} parent=27 // pred_check
          %p203 = pneg %p99
        $region30: #{tpu_custom_call.1} parent=27 // pred_check_branch
          %205 = sbr.rel (%p203) target = $region32
        $region31: #{tpu_custom_call.1} parent=27 // pred_region
          %s206 = sand.u32 %s16, 1
          %s207 = scalar_lea.sflag [#allocation3], %s206
          %s208 = sand.u32 %s89, 1
          %s209 = smul.addr %s208, 128
          %s210 = scalar_lea.vmem [#allocation7], %s209
          %s212 = ssub.s32 2048, 2048
          %213 = vsyncadd %s207, %s212
          %s214 = smul.addr %s16, 128
          %s215 = scalar_lea.hbm %s3, %s214
          %s216 = sshll.u32 %s210, 4
          %s217 = int_to_ptr.vmem [resolvable:$true] %s216
          %222 = dma.hbm_to_vmem [thread:$0]  %s215, 2048, %s217, %s207, 256, 128, 8
        $region32: #{tpu_custom_call.1} parent=27 // pred_fallthru
          _
        // Predicated region
        $region33: #{tpu_custom_call.1} parent=27 // pred_check
          %p223 = pneg %p125
        $region34: #{tpu_custom_call.1} parent=27 // pred_check_branch
          %225 = sbr.rel (%p223) target = $region36
        $region35: #{tpu_custom_call.1} parent=27 // pred_region
          %p226 = scmp.lt.s32.totalorder %s16, 1
          %s227 = scalar_select %p226, %s16, 1
          %s228 = scalar_lea.vmem %s4, %s227
        $region36: #{tpu_custom_call.1} parent=27 // pred_fallthru
          _
      $region28: #{tpu_custom_call.1} parent=5 // pred_fallthru
        _
      %p229 = scmp.le.s32.totalorder 1, %s16
      %p230 = scmp.lt.s32.totalorder %s16, 3
      %p231 = pnand %p229, %p230
      %p232 = pneg %p231
      // Predicated region
      $region37: #{tpu_custom_call.1} parent=5 // pred_check
        _
      $region38: #{tpu_custom_call.1} parent=5 // pred_check_branch
        %234 = sbr.rel (%p231) target = $region40
      $region39: #{tpu_custom_call.1} parent=5 // pred_region
        %s235 = ssub.s32 %s16, 1
        // Predicated region
        $region41: #{tpu_custom_call.1} parent=39 // pred_check
          %p236 = pneg %p37
        $region42: #{tpu_custom_call.1} parent=39 // pred_check_branch
          %238 = sbr.rel (%p236) target = $region44
        $region43: #{tpu_custom_call.1} parent=39 // pred_region
          %239 = dma.done [#allocation3], 128
        $region44: #{tpu_custom_call.1} parent=39 // pred_fallthru
          _
        // Predicated region
        $region45: #{tpu_custom_call.1} parent=39 // pred_check
          %p240 = pneg %p58
        $region46: #{tpu_custom_call.1} parent=39 // pred_check_branch
          %242 = sbr.rel (%p240) target = $region48
        $region47: #{tpu_custom_call.1} parent=39 // pred_region
          %243 = dma.done [#allocation6], 512
        $region48: #{tpu_custom_call.1} parent=39 // pred_fallthru
          _
        %s244 = sand.u32 %s21, 1
        %s245 = scalar_lea.sflag [#allocation3], %s244
        %s246 = sand.u32 %s92, 1
        %s247 = smul.addr %s246, 128
        %s248 = scalar_lea.vmem [#allocation7], %s247
        // Predicated region
        $region49: #{tpu_custom_call.1} parent=39 // pred_check
          %p249 = pneg %p105
        $region50: #{tpu_custom_call.1} parent=39 // pred_check_branch
          %251 = sbr.rel (%p249) target = $region52
        $region51: #{tpu_custom_call.1} parent=39 // pred_region
          %252 = dma.done %s245, 2048
        $region52: #{tpu_custom_call.1} parent=39 // pred_fallthru
          _
        %p253 = pneg %p37
        %p254 = pneg %p34
        %p255 = pneg %p58
        %p256 = pneg %p55
        %p257 = pneg %p79
        %p258 = pneg %p76
        %s259 = sand.u32 %s21, 1
        %s260 = scalar_lea.sflag [#allocation3], %s259
        %s261 = sand.u32 %s92, 1
        %s262 = smul.addr %s261, 128
        %s263 = scalar_lea.vmem [#allocation7], %s262
        %p264 = pneg %p105
        %p265 = pneg %p102
        %p266 = scmp.lt.s32.totalorder %s21, 1
        %s267 = scalar_select %p266, %s21, 1
        %s268 = scalar_lea.vmem %s4, %s267
        %p269 = pneg %p131
        %p270 = pneg %p128
        %p271 = pneg %p157
        %p272 = pneg %p154
        %s273 = sand.u32 %s144, 1
        %s274 = scalar_lea.sflag [#allocation4], %s273
        %s275 = sand.u32 %s144, 1
        %s276 = smul.addr %s275, 8
        %s277 = scalar_lea.vmem [#allocation8], %s276
        %p278 = scmp.lt.s32.totalorder %s21, 1
        %s279 = scalar_select %p278, %s21, 1
        %s280 = scalar_lea.vmem %s4, %s279
        %v281 = vld [vmem:[#allocation2] sm:$0xff]
        %v282 = vld [vmem:[#allocation5] sm:$0xff]
        %v283 = vld [vmem:[#allocation5 + $0x8] sm:$0xff]
        %v284 = vld [vmem:[#allocation5 + $0x10] sm:$0xff]
        %v285 = vld [vmem:[#allocation5 + $0x18] sm:$0xff]
        %v286 = vld [vmem:[%s2] sm:$0x1]
        %v288 = vlaneseq
        %v289 = vshrl.u32 %v288, 7
        %v290 = vsub.s32 0, %v289
        %v291 = vrot.slane %v286, %v290
        %vm293 = vcmask 261120
        %v295 = vsel %vm293, %v281, 0
        %297 = vmatprep.subr.mxu0 0.0
        %298 = vmatpush1.msra.mxu0 0.0
        %299 = vmatprep.subr.mxu0 0.0
        %300 = vmatpush1.msra.mxu0 0.0
        %301 = vmatprep.subr.mxu0 0.0
        %302 = vmatpush1.msra.mxu0 0.0
        %303 = vmatprep.subr.mxu0 0.0
        %304 = vmatpush1.msra.mxu0 0.0
        %305 = vmatprep.subr.mxu0 0.0
        %306 = vmatpush1.msra.mxu0 0.0
        %307 = vmatprep.subr.mxu0 0.0
        %308 = vmatpush1.msra.mxu0 0.0
        %309 = vmatprep.subr.mxu0 0.0
        %310 = vmatpush1.msra.mxu0 0.0
        %311 = vmatprep.subr.mxu0 0.0
        %312 = vmatpush1.msra.mxu0 0.0
        %313 = vmatprep.subr.mxu0 0.0
        %314 = vmatpush1.msra.mxu0 0.0
        %315 = vmatprep.subr.mxu0 0.0
        %316 = vmatpush1.msra.mxu0 0.0
        %317 = vmatprep.subr.mxu0 0.0
        %318 = vmatpush1.msra.mxu0 0.0
        %319 = vmatprep.subr.mxu0 0.0
        %320 = vmatpush1.msra.mxu0 0.0
        %321 = vmatprep.subr.mxu0 0.0
        %322 = vmatpush1.msra.mxu0 %v285
        %323 = vmatprep.subr.mxu0 0.0
        %324 = vmatpush1.msra.mxu0 %v284
        %325 = vmatprep.subr.mxu0 0.0
        %326 = vmatpush1.msra.mxu0 %v283
        %327 = vmatprep.subr.mxu0 0.0
        %328 = vmatpush1.msra.mxu0 %v282
        %329 = vmatprep.subr.mxu0 0.0
        %330 = vmatpush2.msra.mxu0 0.0
        %331 = vmatprep.subr.mxu0 0.0
        %332 = vmatpush2.msra.mxu0 0.0
        %333 = vmatprep.subr.mxu0 0.0
        %334 = vmatpush2.msra.mxu0 0.0
        %335 = vmatprep.subr.mxu0 0.0
        %336 = vmatpush2.msra.mxu0 0.0
        %337 = vmatprep.subr.mxu0 0.0
        %338 = vmatpush2.msra.mxu0 0.0
        %339 = vmatprep.subr.mxu0 0.0
        %340 = vmatpush2.msra.mxu0 0.0
        %341 = vmatprep.subr.mxu0 0.0
        %342 = vmatpush2.msra.mxu0 0.0
        %343 = vmatprep.subr.mxu0 0.0
        %344 = vmatpush2.msra.mxu0 0.0
        %345 = vmatprep.subr.mxu0 0.0
        %346 = vmatpush2.msra.mxu0 0.0
        %347 = vmatprep.subr.mxu0 0.0
        %348 = vmatpush2.msra.mxu0 0.0
        %349 = vmatprep.subr.mxu0 0.0
        %350 = vmatpush2.msra.mxu0 0.0
        %351 = vmatprep.subr.mxu0 0.0
        %352 = vmatpush2.msra.mxu0 0.0
        %353 = vmatprep.subr.mxu0 0.0
        %354 = vmatpush2.msra.mxu0 0.0
        %355 = vmatprep.subr.mxu0 0.0
        %356 = vmatpush2.msra.mxu0 0.0
        %357 = vmatprep.subr.mxu0 0.0
        %358 = vmatpush2.msra.mxu0 0.0
        %359 = vmatprep.subr.mxu0 0.0
        %360 = vmatpush2.msra.mxu0 0.0
        %361 = vmatprep.mubr.f32.mxu0 0.0
        %362 = vmatmul.mubr.f32.gmra.mxu0 %v295
        %v363 = vpop.f32.mrf.mxu0
        %v364 = vadd.f32 %v291, %v363
        %v365 = vpop.f32.mrf.mxu0
        %366 = vdwg.mxu0
        %v367 = vmax.f32 %v364, 0.0
        %v368 = vld [vmem:[%s248] sm:$0xff]
        %v369 = vld [vmem:[%s248 + $0x8] sm:$0xff]
        %v370 = vld [vmem:[%s248 + $0x10] sm:$0xff]
        %v371 = vld [vmem:[%s248 + $0x18] sm:$0xff]
        %v372 = vld [vmem:[%s248 + $0x20] sm:$0xff]
        %v373 = vld [vmem:[%s248 + $0x28] sm:$0xff]
        %v374 = vld [vmem:[%s248 + $0x30] sm:$0xff]
        %v375 = vld [vmem:[%s248 + $0x38] sm:$0xff]
        %v376 = vld [vmem:[%s248 + $0x40] sm:$0xff]
        %v377 = vld [vmem:[%s248 + $0x48] sm:$0xff]
        %v378 = vld [vmem:[%s248 + $0x50] sm:$0xff]
        %v379 = vld [vmem:[%s248 + $0x58] sm:$0xff]
        %v380 = vld [vmem:[%s248 + $0x60] sm:$0xff]
        %v381 = vld [vmem:[%s248 + $0x68] sm:$0xff]
        %v382 = vld [vmem:[%s248 + $0x70] sm:$0xff]
        %v383 = vld [vmem:[%s248 + $0x78] sm:$0xff]
        %v384 = vld [vmem:[%s280] sm:$0x1]
        %v386 = vlaneseq
        %v387 = vshrl.u32 %v386, 7
        %v388 = vsub.s32 0, %v387
        %v389 = vrot.slane %v384, %v388
        %391 = vmatprep.subr.mxu0 0.0
        %392 = vmatpush1.msra.mxu0 %v383
        %393 = vmatprep.subr.mxu0 0.0
        %394 = vmatpush1.msra.mxu0 %v382
        %395 = vmatprep.subr.mxu0 0.0
        %396 = vmatpush1.msra.mxu0 %v381
        %397 = vmatprep.subr.mxu0 0.0
        %398 = vmatpush1.msra.mxu0 %v380
        %399 = vmatprep.subr.mxu0 0.0
        %400 = vmatpush1.msra.mxu0 %v379
        %401 = vmatprep.subr.mxu0 0.0
        %402 = vmatpush1.msra.mxu0 %v378
        %403 = vmatprep.subr.mxu0 0.0
        %404 = vmatpush1.msra.mxu0 %v377
        %405 = vmatprep.subr.mxu0 0.0
        %406 = vmatpush1.msra.mxu0 %v376
        %407 = vmatprep.subr.mxu0 0.0
        %408 = vmatpush1.msra.mxu0 %v375
        %409 = vmatprep.subr.mxu0 0.0
        %410 = vmatpush1.msra.mxu0 %v374
        %411 = vmatprep.subr.mxu0 0.0
        %412 = vmatpush1.msra.mxu0 %v373
        %413 = vmatprep.subr.mxu0 0.0
        %414 = vmatpush1.msra.mxu0 %v372
        %415 = vmatprep.subr.mxu0 0.0
        %416 = vmatpush1.msra.mxu0 %v371
        %417 = vmatprep.subr.mxu0 0.0
        %418 = vmatpush1.msra.mxu0 %v370
        %419 = vmatprep.subr.mxu0 0.0
        %420 = vmatpush1.msra.mxu0 %v369
        %421 = vmatprep.subr.mxu0 0.0
        %422 = vmatpush1.msra.mxu0 %v368
        %423 = vmatprep.subr.mxu0 0.0
        %424 = vmatpush2.msra.mxu0 0.0
        %425 = vmatprep.subr.mxu0 0.0
        %426 = vmatpush2.msra.mxu0 0.0
        %427 = vmatprep.subr.mxu0 0.0
        %428 = vmatpush2.msra.mxu0 0.0
        %429 = vmatprep.subr.mxu0 0.0
        %430 = vmatpush2.msra.mxu0 0.0
        %431 = vmatprep.subr.mxu0 0.0
        %432 = vmatpush2.msra.mxu0 0.0
        %433 = vmatprep.subr.mxu0 0.0
        %434 = vmatpush2.msra.mxu0 0.0
        %435 = vmatprep.subr.mxu0 0.0
        %436 = vmatpush2.msra.mxu0 0.0
        %437 = vmatprep.subr.mxu0 0.0
        %438 = vmatpush2.msra.mxu0 0.0
        %439 = vmatprep.subr.mxu0 0.0
        %440 = vmatpush2.msra.mxu0 0.0
        %441 = vmatprep.subr.mxu0 0.0
        %442 = vmatpush2.msra.mxu0 0.0
        %443 = vmatprep.subr.mxu0 0.0
        %444 = vmatpush2.msra.mxu0 0.0
        %445 = vmatprep.subr.mxu0 0.0
        %446 = vmatpush2.msra.mxu0 0.0
        %447 = vmatprep.subr.mxu0 0.0
        %448 = vmatpush2.msra.mxu0 0.0
        %449 = vmatprep.subr.mxu0 0.0
        %450 = vmatpush2.msra.mxu0 0.0
        %451 = vmatprep.subr.mxu0 0.0
        %452 = vmatpush2.msra.mxu0 0.0
        %453 = vmatprep.subr.mxu0 0.0
        %454 = vmatpush2.msra.mxu0 0.0
        %455 = vmatprep.mubr.f32.mxu0 0.0
        %456 = vmatmul.mubr.f32.gmra.mxu0 %v367
        %v457 = vpop.f32.mrf.mxu0
        %v458 = vadd.f32 %v389, %v457
        %v459 = vpop.f32.mrf.mxu0
        %460 = vdwg.mxu0
        %461 = vst [vmem:[%s277] sm:$0xff] %v458
        %s462 = sand.u32 %s144, 1
        %s463 = scalar_lea.sflag [#allocation4], %s462
        %s464 = sand.u32 %s144, 1
        %s465 = smul.addr %s464, 8
        %s466 = scalar_lea.vmem [#allocation8], %s465
        // Predicated region
        $region53: #{tpu_custom_call.1} parent=39 // pred_check
          %p467 = pneg %p154
        $region54: #{tpu_custom_call.1} parent=39 // pred_check_branch
          %469 = sbr.rel (%p467) target = $region56
        $region55: #{tpu_custom_call.1} parent=39 // pred_region
          %s471 = ssub.s32 128, 128
          %472 = vsyncadd %s463, %s471
          %s473 = smul.addr %s21, 128
          %s474 = scalar_lea.hbm %s5, %s473
          %s476 = sshll.u32 %s466, 4
          %s477 = int_to_ptr.vmem [resolvable:$true] %s476
          %479 = dma.vmem_to_hbm [thread:$0]  %s477, 128, %s474, %s463
        $region56: #{tpu_custom_call.1} parent=39 // pred_fallthru
          _
      $region40: #{tpu_custom_call.1} parent=5 // pred_fallthru
        _
      %p480 = scmp.le.s32.totalorder 2, %s16
      // Predicated region
      $region57: #{tpu_custom_call.1} parent=5 // pred_check
        %p481 = pneg %p480
      $region58: #{tpu_custom_call.1} parent=5 // pred_check_branch
        %483 = sbr.rel (%p481) target = $region60
      $region59: #{tpu_custom_call.1} parent=5 // pred_region
        %s484 = ssub.s32 %s16, 2
        // Predicated region
        $region61: #{tpu_custom_call.1} parent=59 // pred_check
          %p485 = pneg %p160
        $region62: #{tpu_custom_call.1} parent=59 // pred_check_branch
          %487 = sbr.rel (%p485) target = $region64
        $region63: #{tpu_custom_call.1} parent=59 // pred_region
          %s488 = sand.u32 %s145, 1
          %s489 = scalar_lea.sflag [#allocation4], %s488
          %s490 = sand.u32 %s145, 1
          %s491 = smul.addr %s490, 8
          %s492 = scalar_lea.vmem [#allocation8], %s491
          %493 = dma.done %s489, 128
        $region64: #{tpu_custom_call.1} parent=59 // pred_fallthru
          _
      $region60: #{tpu_custom_call.1} parent=5 // pred_fallthru
        _
    $region6: #{tpu_custom_call.1} parent=1 // loop_footer
      %s20 = sadd.s32 1, %s16
    $region7: #{tpu_custom_call.1} parent=1 // loop_footer_branch
      %15 = sbr.rel target = $region3
    $region8: #{tpu_custom_call.1} parent=1 // loop_exit
      _
    %494 = vsyncpa [#allocation3], 1
    %s495 = scalar_lea.sflag [#allocation3], 1
    %496 = vsyncpa %s495, 1
    %497 = vsyncpa [#allocation6], 1
    %498 = vsyncpa [#allocation4], 1
    %s499 = scalar_lea.sflag [#allocation4], 1
    %500 = vsyncpa %s499, 1

</llo_original>
